<compile_context>
chip_gen: v5e
topology: v5e:2x2
jax: 0.10.0
libtpu: 0.0.40
codegen_flags: <defaults>
</compile_context>

<pallas_src>
import jax
import jax.numpy as jnp
from jax.experimental import pallas as pl
from jax.experimental.pallas import tpu as pltpu

_LANE_WIDTH = 512           # large-path slab width (multiple of 128 lanes)
_ROW_TILE = 2048            # rows per grid step -> 2048*512*4 B = 4 MiB/block
_SMALL_LIMIT = 16 * 1024    # elements; <= this -> single whole-array block


def _sigmoid_kernel(x_ref, o_ref):
    x = x_ref[...]
    # sigmoid(x) = 1 / (1 + exp(-x)).
    # jnp.exp is the single EUP op per element; pl.reciprocal(approx=False) is
    # an exact VALU Newton divide (full f32 accuracy for the 1e-6 check).
    o_ref[...] = pl.reciprocal(1.0 + jnp.exp(-x), approx=False)


def sigmoid_pallas(x):
    """Elementwise sigmoid via a Pallas kernel."""
    orig_shape = x.shape
    orig_dtype = x.dtype
    total = x.size
    flat = x.reshape(-1)

    if total <= _SMALL_LIMIT:
        # Small path (taken for the [1, 432, 1, 1] reference shape):
        # one whole-array VMEM block, no grid, no index_map, no pad/slice.
        view = flat.reshape(1, total)
        out = pl.pallas_call(
            _sigmoid_kernel,
            out_shape=jax.ShapeDtypeStruct(view.shape, orig_dtype),
            in_specs=[pl.BlockSpec(memory_space=pltpu.VMEM)],
            out_specs=pl.BlockSpec(memory_space=pltpu.VMEM),
        )(view)
        return out.reshape(orig_shape)

    # Large-input path (never taken at the reference shape): lane-dense
    # (rows, 512) slab, 4 MiB blocks, parallel 1-D grid over row tiles.
    block_elems = _ROW_TILE * _LANE_WIDTH
    padded_total = -(-total // block_elems) * block_elems
    if padded_total != total:
        flat = jnp.pad(flat, (0, padded_total - total))
    rows = padded_total // _LANE_WIDTH
    slab = flat.reshape(rows, _LANE_WIDTH)

    out = pl.pallas_call(
        _sigmoid_kernel,
        out_shape=jax.ShapeDtypeStruct(slab.shape, orig_dtype),
        grid=(rows // _ROW_TILE,),
        in_specs=[pl.BlockSpec((_ROW_TILE, _LANE_WIDTH), lambda i: (i, 0))],
        out_specs=pl.BlockSpec((_ROW_TILE, _LANE_WIDTH), lambda i: (i, 0)),
        compiler_params=pltpu.CompilerParams(
            dimension_semantics=("parallel",),    # shards over v7x's 2 TCs
            vmem_limit_bytes=32 << 20),
    )(slab)

    return out.reshape(-1)[:total].reshape(orig_shape)


class M:
    """JAX mirror of the PyTorch module: forward(x) = sigmoid(x)."""

    def __init__(self):
        pass  # no parameters

    def __call__(self, x214):
        return sigmoid_pallas(x214)


if __name__ == "__main__":
    key = jax.random.PRNGKey(0)
    # Same shape as the reference module's input: [1, 432, 1, 1]
    x214 = jax.random.normal(key, (1, 432, 1, 1), dtype=jnp.float32)

    model = M()
    y = model(x214)
    y = jax.block_until_ready(y)

    # Sanity check against the pure-JAX reference.
    ref = jax.nn.sigmoid(x214)
    assert y.shape == x214.shape
    assert jnp.allclose(y, ref, atol=1e-6, rtol=1e-6)

    print("KERNEL_OK")
</pallas_src>

<mosaic_0001>
module attributes {stable_mosaic.version = 11 : i64} {
  func.func @_sigmoid_kernel(%arg0: memref<1x432xf32, #tpu.memory_space<vmem>>, %arg1: memref<1x432xf32, #tpu.memory_space<vmem>>) attributes {dimension_semantics = [], scalar_prefetch = 0 : i64, scratch_operands = 0 : i64, tpu.core_type = #tpu.core_type<tc>} {
    %c0 = arith.constant 0 : index
    %c0_0 = arith.constant 0 : index
    %0 = vector.load %arg0[%c0, %c0_0] : memref<1x432xf32, #tpu.memory_space<vmem>>, vector<1x432xf32>
    %cst = arith.constant 0.000000e+00 : f32
    %1 = vector.broadcast %cst : f32 to vector<1x432xf32>
    %2 = arith.subf %1, %0 : vector<1x432xf32>
    %3 = math.exp %2 : vector<1x432xf32>
    %cst_1 = arith.constant 1.000000e+00 : f32
    %4 = vector.broadcast %cst_1 : f32 to vector<1x432xf32>
    %5 = arith.addf %4, %3 : vector<1x432xf32>
    %6 = tpu.reciprocal %5 : vector<1x432xf32> -> vector<1x432xf32>
    %c0_2 = arith.constant 0 : index
    %c0_3 = arith.constant 0 : index
    %7 = vector.load %arg1[%c0_2, %c0_3] : memref<1x432xf32, #tpu.memory_space<vmem>>, vector<1x432xf32>
    tpu.vector_store %arg1[%c0_2, %c0_3], %6 {strides = array<i32>} : memref<1x432xf32, #tpu.memory_space<vmem>>, vector<1x432xf32>,
    return
  }
}

</mosaic_0001>

<llo_original>
// kernel: tpu_custom_call.1
$region0: #{tpu_custom_call.1}
  #allocation0 [shape = 'u32[]', space=smem, size = 0x4, offset = 0x4, fixed_abs, tag = 'smem constant byte address 0x4 - core index']
  #allocation1 [shape = 'u32[72,128]{1,0:T(1,128)}', space=vmem, size = 0x9000, scoped, tag = 'internal scratch']
  %s0 = inlined_call_operand.hbm [shape: f32[1,432], index: 0, kind: input, shape index: {}]
  %s1 = inlined_call_operand.hbm [shape: f32[1,432], index: 1, kind: output, shape index: {}]
  %s2 = sld [smem:[#allocation0]]
  $region18: #{tpu_custom_call.1} parent=0
    _
  %s4 = ssub.s32 1, %s2
  %s5 = scalar_select 0, %s4, %s2
  $region1: #{tpu_custom_call.1} parent=0
    #allocation2 [shape = 'u8[2048]{0}', space=vmem, size = 0x800, scoped, tag = 'input window, operand 0, single buffered']
    #allocation3 [shape = 's32[1]{0}', space=sflag, size = 0x4, scoped, tag = 'scoped memory for tpu_custom_call.1']
    #allocation4 [shape = 's32[1]{0}', space=sflag, size = 0x4, scoped, tag = 'scoped memory for tpu_custom_call.1']
    #allocation5 [shape = 'u8[2048]{0}', space=vmem, size = 0x800, scoped, tag = 'output window, operand 0, single buffered']
    %6 = vsyncpa [#allocation3], 0
    %7 = vsyncpa [#allocation4], 0
    // Predicated region
    $region2: #{tpu_custom_call.1} parent=1 // pred_check
      _
    $region3: #{tpu_custom_call.1} parent=1 // pred_check_branch
      %9 = sbr.rel (0) target = $region5
    $region4: #{tpu_custom_call.1} parent=1 // pred_region
      %11 = vsyncadd [#allocation3], 0
      %s13 = sshll.u32 %s0, 4
      %s14 = int_to_ptr.hbm [resolvable:$true] %s13
      %s15 = sshll.u32 [#allocation2], 4
      %s16 = int_to_ptr.vmem [resolvable:$true] %s15
      %18 = dma.hbm_to_vmem [thread:$0]  %s14, 64, %s16, [#allocation3]
    $region5: #{tpu_custom_call.1} parent=1 // pred_fallthru
      _
    // Predicated region
    $region6: #{tpu_custom_call.1} parent=1 // pred_check
      _
    $region7: #{tpu_custom_call.1} parent=1 // pred_check_branch
      %20 = sbr.rel (0) target = $region9
    $region8: #{tpu_custom_call.1} parent=1 // pred_region
      %22 = dma.done [#allocation3], 64
    $region9: #{tpu_custom_call.1} parent=1 // pred_fallthru
      _
    %v23 = vld [vmem:[#allocation2] sm:$0xf]
    %v24 = vsub.f32 0.0, %v23
    %v25 = vmul.f32 %v24, 1.442695
    %v26 = vpow.pop %v25
    %v27 = vadd.f32 %v26, 1.0
    %v28 = vrcp.pop %v27
    %v29 = vmul.f32 %v27, %v28
    %v30 = vsub.f32 1.0, %v29
    %v31 = vmul.f32 %v28, %v30
    %v32 = vadd.f32 %v28, %v31
    %vm33 = vweird.f32 %v27
    %vm34 = vweird.f32 %v28
    %vm35 = vmor %vm33, %vm34
    %v36 = vsel %vm35, %v28, %v32
    %v37 = vand.u32 2147483647, %v27
    %vm38 = vcmp.eq.f32.partialorder %v37, 8.507059e+37
    %v39 = vand.u32 %v27, 2147483648
    %v40 = vor.u32 1.1754944e-38, %v39
    %v41 = vsel %vm38, %v40, %v36
    %v42 = vlaneseq
    %vm43 = vcmp.ge.s32.totalorder %v42, 0
    %vm44 = vcmp.lt.s32.totalorder %v42, 432
    %vm45 = vmand %vm43, %vm44
    %46 = vst.msk [vmem:[#allocation5] sm:$0xf] %vm45, %v41
    // Predicated region
    $region10: #{tpu_custom_call.1} parent=1 // pred_check
      _
    $region11: #{tpu_custom_call.1} parent=1 // pred_check_branch
      %48 = sbr.rel (0) target = $region13
    $region12: #{tpu_custom_call.1} parent=1 // pred_region
      %50 = vsyncadd [#allocation4], 0
      %s52 = sshll.u32 [#allocation5], 4
      %s53 = int_to_ptr.vmem [resolvable:$true] %s52
      %s54 = sshll.u32 %s1, 4
      %s55 = int_to_ptr.hbm [resolvable:$true] %s54
      %57 = dma.vmem_to_hbm [thread:$0]  %s53, 64, %s55, [#allocation4]
    $region13: #{tpu_custom_call.1} parent=1 // pred_fallthru
      _
    // Predicated region
    $region14: #{tpu_custom_call.1} parent=1 // pred_check
      _
    $region15: #{tpu_custom_call.1} parent=1 // pred_check_branch
      %59 = sbr.rel (0) target = $region17
    $region16: #{tpu_custom_call.1} parent=1 // pred_region
      %61 = dma.done [#allocation4], 64
    $region17: #{tpu_custom_call.1} parent=1 // pred_fallthru
      _
    %62 = vsyncpa [#allocation3], 1
    %63 = vsyncpa [#allocation4], 1

</llo_original>
